<compile_context>
chip_gen: v5e
topology: v5e:2x2
jax: 0.10.0
libtpu: 0.0.40
codegen_flags: <defaults>
</compile_context>

<pallas_src>
import math

import jax
import jax.numpy as jnp
from jax.experimental import pallas as pl
from jax.experimental.pallas import tpu as pltpu

EPS = 1e-9

_LANE = 128
_TR_MAX = 256                 # max sublane rows per block
_TT_MAX = 16384               # max lane extent per block
_TARGET_BLOCK_BYTES = 4 << 20  # ~4 MiB x-blocks; 2 bufs * (in+out) = 16 MiB


def _round_up(n: int, m: int) -> int:
    return ((n + m - 1) // m) * m


def _sublane_granularity(dtype) -> int:
    itemsize = jnp.dtype(dtype).itemsize
    return {4: 8, 2: 16, 1: 32}.get(itemsize, 8)


def _pick_vmem_limit(default_bytes: int = 32 << 20) -> int:
    """Per-generation scoped VMEM budget (half of physical, >= 32 MiB)."""
    try:
        info = pltpu.get_tpu_info()
        cap = getattr(info, "vmem_capacity_bytes", None)
        if cap:
            return int(min(max(cap // 2, default_bytes), 128 << 20))
    except Exception:
        pass
    return default_bytes


def snake_kernel(x_ref, two_alpha_ref, half_inv_ref, o_ref):
    # x_ref / o_ref: (tr, tt) tile; two_alpha_ref / half_inv_ref: (tr, 1) f32.
    x = x_ref[...].astype(jnp.float32)
    two_alpha = two_alpha_ref[...]                      # 2 * alpha       (tr, 1)
    half_inv = half_inv_ref[...]                        # 0.5/(alpha+eps) (tr, 1)
    # sin(a*x)^2 == 0.5 * (1 - cos(2*a*x)); the 0.5 is folded into half_inv.
    y = x + (1.0 - jnp.cos(two_alpha * x)) * half_inv
    o_ref[...] = y.astype(o_ref.dtype)


def snake_pallas(x: jax.Array, alpha: jax.Array, *, donate_x: bool = False) -> jax.Array:
    """Snake forward: x + (alpha+eps)^-1 * sin(alpha*x)^2 (beta == alpha).

    x:     (B, C, *spatial) — flattened to (B*C, T) internally.
    alpha: per-channel parameter, any shape reshapeable to (C,)
           (e.g. the nn.Parameter shape (1, C, 1)).
    """
    orig_shape = x.shape
    B, C = orig_shape[0], orig_shape[1]
    T = int(math.prod(orig_shape[2:]))
    R = B * C

    x2 = x.reshape(R, T)  # contiguous merge of leading dims -> free (bitcast)

    a = jnp.reshape(alpha, (C,)).astype(jnp.float32)
    a_rows = jnp.broadcast_to(a[None, :], (B, C)).reshape(R, 1)   # B*C*4 bytes
    two_alpha = 2.0 * a_rows
    half_inv = 0.5 / (a_rows + EPS)

    itemsize = jnp.dtype(x.dtype).itemsize
    sub = _sublane_granularity(x.dtype)

    # Row tile: full sublane occupancy, capped at _TR_MAX.
    tr = min(_round_up(R, sub), _TR_MAX)
    # Lane tile: sized from the byte budget so blocks stay ~4 MiB even when
    # tr is small, never below 128 lanes, never past the (padded) T extent.
    tt_cap = max(_LANE, (_TARGET_BLOCK_BYTES // (tr * itemsize)) // _LANE * _LANE)
    tt = min(_round_up(T, _LANE), tt_cap, _TT_MAX)

    # cdiv grid: edge blocks overhang; OOB reads are stale-but-harmless for
    # this elementwise op and OOB stores are dropped. No pad / slice-back.
    grid = (pl.cdiv(R, tr), pl.cdiv(T, tt))

    extra_kwargs = {}
    if donate_x:
        # Shapes match exactly (no padding), so the output can reuse x's
        # buffer when the caller no longer needs x.
        extra_kwargs["input_output_aliases"] = {0: 0}

    out2 = pl.pallas_call(
        snake_kernel,
        out_shape=jax.ShapeDtypeStruct((R, T), x.dtype),
        grid_spec=pltpu.PrefetchScalarGridSpec(
            num_scalar_prefetch=0,
            grid=grid,
            in_specs=[
                pl.BlockSpec((tr, tt), lambda r, t: (r, t)),
                pl.BlockSpec((tr, 1), lambda r, t: (r, 0)),
                pl.BlockSpec((tr, 1), lambda r, t: (r, 0)),
            ],
            out_specs=pl.BlockSpec((tr, tt), lambda r, t: (r, t)),
        ),
        compiler_params=pltpu.CompilerParams(
            # Pure streaming elementwise op: both grid axes independent, so
            # Mosaic may shard freely across TensorCores (2 TCs on v7x).
            dimension_semantics=("parallel", "parallel"),
            vmem_limit_bytes=_pick_vmem_limit(),
        ),
        **extra_kwargs,
    )(x2, two_alpha, half_inv)

    return out2.reshape(orig_shape)


def snake_ref(x, alpha):
    """Pure-JAX reference matching the PyTorch snake() semantics (beta==alpha)."""
    shape = x.shape
    B, C = shape[0], shape[1]
    xf = x.reshape(B, C, -1)
    a = jnp.reshape(alpha, (1, C, 1))
    out = xf + (1.0 / (a + EPS)) * jnp.sin(a * xf) ** 2
    return out.reshape(shape)


if __name__ == "__main__":
    key = jax.random.PRNGKey(0)
    k1, k2, k3, k4 = jax.random.split(key, 4)

    # Primary check: (B, C, T) = (2, 4, 16), alpha initialized exactly like
    # nn.Parameter(torch.ones(1, channels, 1)).
    B, C, T = 2, 4, 16
    x = jax.random.normal(k1, (B, C, T), dtype=jnp.float32)
    alpha = jnp.ones((1, C, 1), dtype=jnp.float32)

    out = snake_pallas(x, alpha)
    jax.block_until_ready(out)
    ref = snake_ref(x, alpha)
    assert out.shape == x.shape and out.dtype == x.dtype
    assert jnp.allclose(out, ref, atol=1e-5, rtol=1e-5), "mismatch (ones alpha)"

    # Secondary check: non-trivial alpha and a 4-D input, exercising the
    # reshape-to-(B*C, T) path.
    x2 = jax.random.normal(k2, (2, 4, 4, 8), dtype=jnp.float32)
    alpha2 = 1.0 + 0.5 * jax.random.uniform(k3, (1, 4, 1), dtype=jnp.float32)
    out2 = snake_pallas(x2, alpha2)
    jax.block_until_ready(out2)
    ref2 = snake_ref(x2, alpha2)
    assert out2.shape == x2.shape and out2.dtype == x2.dtype
    assert jnp.allclose(out2, ref2, atol=1e-5, rtol=1e-5), "mismatch (4-D input)"

    # Ragged check: C and T not multiples of (8, 128) -> exercises the cdiv
    # edge-block (no pad / no slice-back) path.
    x3 = jax.random.normal(k4, (2, 12, 300), dtype=jnp.float32)
    alpha3 = 0.5 + jax.random.uniform(k3, (1, 12, 1), dtype=jnp.float32)
    out3 = snake_pallas(x3, alpha3)
    jax.block_until_ready(out3)
    ref3 = snake_ref(x3, alpha3)
    assert out3.shape == x3.shape and out3.dtype == x3.dtype
    assert jnp.allclose(out3, ref3, atol=1e-5, rtol=1e-5), "mismatch (ragged shape)"

    print("KERNEL_OK")
</pallas_src>

<mosaic_0001>
module attributes {stable_mosaic.version = 11 : i64} {
  func.func @snake_kernel(%arg0: i32, %arg1: i32, %arg2: memref<8x128xf32, #tpu.memory_space<vmem>>, %arg3: memref<8x1xf32, #tpu.memory_space<vmem>>, %arg4: memref<8x1xf32, #tpu.memory_space<vmem>>, %arg5: memref<8x128xf32, #tpu.memory_space<vmem>>) attributes {dimension_semantics = [#tpu.dimension_semantics<parallel>, #tpu.dimension_semantics<parallel>], iteration_bounds = array<i64: 1, 1>, scalar_prefetch = 0 : i64, scratch_operands = 0 : i64, tpu.core_type = #tpu.core_type<tc>, window_params = [{transform_indices = @transform_0, window_bounds = array<i64: 8, 128>}, {transform_indices = @transform_1, window_bounds = array<i64: 8, 1>}, {transform_indices = @transform_2, window_bounds = array<i64: 8, 1>}, {transform_indices = @transform_3, window_bounds = array<i64: 8, 128>}]} {
    %c0 = arith.constant 0 : index
    %c0_0 = arith.constant 0 : index
    %0 = vector.load %arg2[%c0, %c0_0] : memref<8x128xf32, #tpu.memory_space<vmem>>, vector<8x128xf32>
    %c0_1 = arith.constant 0 : index
    %c0_2 = arith.constant 0 : index
    %1 = vector.load %arg3[%c0_1, %c0_2] : memref<8x1xf32, #tpu.memory_space<vmem>>, vector<8x1xf32>
    %c0_3 = arith.constant 0 : index
    %c0_4 = arith.constant 0 : index
    %2 = vector.load %arg4[%c0_3, %c0_4] : memref<8x1xf32, #tpu.memory_space<vmem>>, vector<8x1xf32>
    %3 = vector.broadcast %1 : vector<8x1xf32> to vector<8x128xf32>
    %4 = arith.mulf %3, %0 : vector<8x128xf32>
    %5 = math.cos %4 : vector<8x128xf32>
    %cst = arith.constant 1.000000e+00 : f32
    %6 = vector.broadcast %cst : f32 to vector<8x128xf32>
    %7 = arith.subf %6, %5 : vector<8x128xf32>
    %8 = vector.broadcast %2 : vector<8x1xf32> to vector<8x128xf32>
    %9 = arith.mulf %7, %8 : vector<8x128xf32>
    %10 = arith.addf %0, %9 : vector<8x128xf32>
    %c0_5 = arith.constant 0 : index
    %c0_6 = arith.constant 0 : index
    %11 = vector.load %arg5[%c0_5, %c0_6] : memref<8x128xf32, #tpu.memory_space<vmem>>, vector<8x128xf32>
    tpu.vector_store %arg5[%c0_5, %c0_6], %10 {strides = array<i32>} : memref<8x128xf32, #tpu.memory_space<vmem>>, vector<8x128xf32>,
    return
  }
  func.func @transform_0(%arg0: i32, %arg1: i32) -> (i32, i32) {
    %c0_i32 = arith.constant 0 : i32
    return %arg0, %arg1 : i32, i32
  }
  func.func @transform_1(%arg0: i32, %arg1: i32) -> (i32, i32) {
    %c0_i32 = arith.constant 0 : i32
    %c0_i32_0 = arith.constant 0 : i32
    return %arg0, %c0_i32 : i32, i32
  }
  func.func @transform_2(%arg0: i32, %arg1: i32) -> (i32, i32) {
    %c0_i32 = arith.constant 0 : i32
    %c0_i32_0 = arith.constant 0 : i32
    return %arg0, %c0_i32 : i32, i32
  }
  func.func @transform_3(%arg0: i32, %arg1: i32) -> (i32, i32) {
    %c0_i32 = arith.constant 0 : i32
    return %arg0, %arg1 : i32, i32
  }
}

</mosaic_0001>

<llo_original>
// kernel: tpu_custom_call.1
$region0: #{tpu_custom_call.1}
  #allocation0 [shape = 'u32[]', space=smem, size = 0x4, offset = 0x4, fixed_abs, tag = 'smem constant byte address 0x4 - core index']
  #allocation1 [shape = 'u32[72,128]{1,0:T(1,128)}', space=vmem, size = 0x9000, scoped, tag = 'internal scratch']
  %s0 = inlined_call_operand.vmem [shape: f32[8,16], index: 0, kind: input, shape index: {}]
  %s1 = inlined_call_operand.vmem [shape: f32[8,1], index: 1, kind: input, shape index: {}]
  %s2 = inlined_call_operand.vmem [shape: f32[8,1], index: 2, kind: input, shape index: {}]
  %s3 = inlined_call_operand.hbm [shape: f32[8,16], index: 3, kind: output, shape index: {}]
  %s4 = sld [smem:[#allocation0]]
  $region22: #{tpu_custom_call.1} parent=0
    _
  %s6 = ssub.s32 1, %s4
  %s7 = scalar_select 0, %s6, %s4
  $region1: #{tpu_custom_call.1} parent=0
    #allocation2 [shape = 'u8[4096]{0}', space=vmem, size = 0x1000, scoped, tag = 'output window, operand 0, single buffered']
    #allocation3 [shape = 's32[1]{0}', space=sflag, size = 0x4, scoped, tag = 'scoped memory for tpu_custom_call.1']
    %8 = vsyncpa [#allocation3], 0
    // Predicated region
    $region2: #{tpu_custom_call.1} parent=1 // pred_check
      _
    $region3: #{tpu_custom_call.1} parent=1 // pred_check_branch
      %10 = sbr.rel (0) target = $region5
    $region4: #{tpu_custom_call.1} parent=1 // pred_region
      _
    $region5: #{tpu_custom_call.1} parent=1 // pred_fallthru
      _
    // Predicated region
    $region6: #{tpu_custom_call.1} parent=1 // pred_check
      _
    $region7: #{tpu_custom_call.1} parent=1 // pred_check_branch
      %12 = sbr.rel (0) target = $region9
    $region8: #{tpu_custom_call.1} parent=1 // pred_region
      _
    $region9: #{tpu_custom_call.1} parent=1 // pred_fallthru
      _
    // Predicated region
    $region10: #{tpu_custom_call.1} parent=1 // pred_check
      _
    $region11: #{tpu_custom_call.1} parent=1 // pred_check_branch
      %14 = sbr.rel (0) target = $region13
    $region12: #{tpu_custom_call.1} parent=1 // pred_region
      _
    $region13: #{tpu_custom_call.1} parent=1 // pred_fallthru
      _
    %v15 = vld [vmem:[%s0] sm:$0xff]
    %v16 = vld [vmem:[%s1] sm:$0xff]
    %v17 = vld [vmem:[%s2] sm:$0xff]
    %19 = vset.pattern.permute.xlu0 0
    %20 = vperm.xlu0 %19, %v16
    %v21 = vpop.permute.xlu0 %20
    %v23 = vmul.f32 %v21, %v15
    %v24 = vand.u32 2147483647, %v23
    %vm25 = vcmp.le.f32.partialorder %v24, 0.7853982
    %vm26 = vcmp.lt.s32.totalorder %v23, 0
    %v27 = vand.u32 %v23, 2139095040
    %v28 = vshrl.u32 %v27, 23
    %v29 = vsub.s32 %v28, 127
    %v30 = vand.u32 2147483647, %v23
    %v31 = vand.u32 %v30, 8388607
    %v32 = vor.u32 %v31, 8388608
    %v33 = vsub.s32 0, %v32
    %v34 = vadd.s32 %v29, 1
    %vm35 = vcmp.gt.s32.totalorder %v34, 0
    %v36 = vsel %vm35, %v34, 0
    %v37 = vshrl.u32 %v36, 5
    %v38 = vand.u32 %v36, 31
    %v39 = vsub.s32 32, %v38
    %v40 = vshrl.u32 683565275, %v39
    %v41 = vshll.u32 683565275, %v38
    %v42 = vshrl.u32 2475754826, %v39
    %v43 = vor.u32 %v41, %v42
    %v44 = vshll.u32 2475754826, %v38
    %v45 = vshrl.u32 2131351028, %v39
    %v46 = vor.u32 %v44, %v45
    %v47 = vshll.u32 2131351028, %v38
    %v48 = vshrl.u32 2102212464, %v39
    %v49 = vor.u32 %v47, %v48
    %v50 = vshll.u32 2102212464, %v38
    %v51 = vshrl.u32 920167782, %v39
    %v52 = vor.u32 %v50, %v51
    %v53 = vshll.u32 920167782, %v38
    %v54 = vshrl.u32 1326507024, %v39
    %v55 = vor.u32 %v53, %v54
    %vm56 = vcmp.lt.s32.totalorder %v37, 1
    %vm57 = vcmp.lt.s32.totalorder %v37, 2
    %vm58 = vcmp.lt.s32.totalorder %v37, 3
    %vm59 = vcmp.lt.s32.totalorder %v37, 4
    %v60 = vsel %vm56, %v40, %v43
    %v61 = vsel %vm59, %v49, 2102212464
    %v62 = vsel %vm58, %v46, %v61
    %v63 = vsel %vm57, %v60, %v62
    %v64 = vsel %vm56, %v43, %v46
    %v65 = vsel %vm59, %v52, 920167782
    %v66 = vsel %vm58, %v49, %v65
    %v67 = vsel %vm57, %v64, %v66
    %v68 = vsel %vm56, %v46, %v49
    %v69 = vsel %vm59, %v55, 1326507024
    %v70 = vsel %vm58, %v52, %v69
    %v71 = vsel %vm57, %v68, %v70
    %v72 = vshll.u32 %v32, 8
    %v73 = vand.u32 %v72, 65535
    %v74 = vshrl.u32 %v72, 16
    %v75 = vand.u32 %v71, 65535
    %v76 = vshrl.u32 %v71, 16
    %v77 = vmul.u32 %v73, %v75
    %v78 = vmul.u32 %v73, %v76
    %v79 = vmul.u32 %v74, %v75
    %v80 = vmul.u32 %v74, %v76
    %v81 = vshll.u32 %v78, 16
    %v82 = vshrl.u32 %v78, 16
    %v83 = vshll.u32 %v79, 16
    %v84 = vshrl.u32 %v79, 16
    %vm85 = vc.u32 %v77, %v81
    %v86 = vsel %vm85, 1, 0
    %v87 = vadd.s32 %v77, %v81
    %v88 = vadd.s32 %v80, %v86
    %vm89 = vc.u32 %v87, %v83
    %v90 = vsel %vm89, 1, 0
    %v91 = vadd.s32 %v87, %v83
    %v92 = vadd.s32 %v88, %v90
    %v93 = vadd.s32 %v92, %v82
    %v94 = vadd.s32 %v93, %v84
    %v95 = vand.u32 %v72, 65535
    %v96 = vshrl.u32 %v72, 16
    %v97 = vand.u32 %v67, 65535
    %v98 = vshrl.u32 %v67, 16
    %v99 = vmul.u32 %v95, %v97
    %v100 = vmul.u32 %v95, %v98
    %v101 = vmul.u32 %v96, %v97
    %v102 = vmul.u32 %v96, %v98
    %v103 = vshll.u32 %v100, 16
    %v104 = vshrl.u32 %v100, 16
    %v105 = vshll.u32 %v101, 16
    %v106 = vshrl.u32 %v101, 16
    %vm107 = vc.u32 %v99, %v103
    %v108 = vsel %vm107, 1, 0
    %v109 = vadd.s32 %v99, %v103
    %v110 = vadd.s32 %v102, %v108
    %vm111 = vc.u32 %v109, %v105
    %v112 = vsel %vm111, 1, 0
    %v113 = vadd.s32 %v109, %v105
    %v114 = vadd.s32 %v110, %v112
    %v115 = vadd.s32 %v114, %v104
    %v116 = vadd.s32 %v115, %v106
    %v117 = vmul.u32 %v72, %v63
    %v118 = vadd.s32 %v94, %v113
    %vm119 = vc.u32 %v94, %v113
    %v120 = vadd.s32 %v116, 1
    %v121 = vsel %vm119, %v120, %v116
    %v122 = vadd.s32 %v117, %v121
    %v123 = vadd.s32 %v122, 536870912
    %v124 = vshrl.u32 %v123, 30
    %v125 = vshll.u32 %v124, 30
    %v126 = vsub.s32 %v122, %v125
    %vm127 = vcmp.lt.s32.totalorder %v126, 0
    %v128 = vsub.s32 0, %v126
    %v129 = vsel %vm127, %v128, %v126
    %v130 = vclz %v129
    %v131 = vsub.s32 %v130, 2
    %vm132 = vcmp.gt.s32.totalorder 0, %v131
    %v133 = vsel %vm132, 0, %v131
    %v134 = vsub.s32 32, %v133
    %v135 = vshll.u32 %v126, %v133
    %v136 = vshrl.u32 %v118, %v134
    %v137 = vor.u32 %v135, %v136
    %v138 = vsub.s32 4294967266, %v133
    %v139 = vadd.s32 %v138, 127
    %v140 = vshll.u32 %v139, 23
    %v141 = vor.u32 4788187, %v140
    %v142 = vand.u32 2147483647, %v141
    %v144 = vcvt.s32.f32 %v137
    %v145 = vmul.f32 %v144, %v142
    %v146 = vxor.u32 %v145, 2147483648
    %v147 = vsel %vm26, %v146, %v145
    %v148 = vsub.s32 4, %v124
    %v149 = vsel %vm26, %v148, %v124
    %v150 = vsel %vm25, %v23, %v147
    %v151 = vsel %vm25, 0, %v149
    %v152 = vmul.f32 %v150, %v150
    %v153 = vmul.f32 %v152, -0.001358992
    %v154 = vadd.f32 %v153, 0.041655596
    %v155 = vmul.f32 %v152, %v154
    %v156 = vadd.f32 %v155, -0.4999988
    %v157 = vmul.f32 %v152, %v156
    %v158 = vadd.f32 1.0, %v157
    %v159 = vmul.f32 %v150, %v150
    %v160 = vmul.f32 %v159, -0.00019511016
    %v161 = vadd.f32 %v160, 0.008332121
    %v162 = vmul.f32 %v159, %v161
    %v163 = vadd.f32 %v162, -0.16666654
    %v164 = vmul.f32 %v159, %v163
    %v165 = vadd.f32 %v164, 1.0
    %v166 = vmul.f32 %v165, %v150
    %vm167 = vweird.f32 %v23
    %v168 = vand.u32 %v151, 3
    %vm169 = vcmp.lt.s32.totalorder %v168, 2
    %vm170 = vcmp.eq.s32.totalorder %v168, 0
    %v171 = vxor.u32 %v166, 2147483648
    %v172 = vsel %vm170, %v158, %v171
    %vm173 = vcmp.eq.s32.totalorder %v168, 2
    %v174 = vxor.u32 %v158, 2147483648
    %v175 = vsel %vm173, %v174, %v166
    %v176 = vsel %vm169, %v172, %v175
    %v177 = vsel %vm167, nan, %v176
    %v178 = vsub.f32 1.0, %v177
    %180 = vset.pattern.permute.xlu0 0
    %181 = vperm.xlu0 %180, %v17
    %v182 = vpop.permute.xlu0 %181
    %v184 = vmul.f32 %v178, %v182
    %v185 = vadd.f32 %v15, %v184
    %186 = vst [vmem:[#allocation2] sm:$0xff] %v185
    // Predicated region
    $region14: #{tpu_custom_call.1} parent=1 // pred_check
      _
    $region15: #{tpu_custom_call.1} parent=1 // pred_check_branch
      %188 = sbr.rel (0) target = $region17
    $region16: #{tpu_custom_call.1} parent=1 // pred_region
      %190 = vsyncadd [#allocation3], 0
      %s192 = sshll.u32 [#allocation2], 4
      %s193 = int_to_ptr.vmem [resolvable:$true] %s192
      %s194 = sshll.u32 %s3, 4
      %s195 = int_to_ptr.hbm [resolvable:$true] %s194
      %197 = dma.vmem_to_hbm [thread:$0]  %s193, 128, %s195, [#allocation3]
    $region17: #{tpu_custom_call.1} parent=1 // pred_fallthru
      _
    // Predicated region
    $region18: #{tpu_custom_call.1} parent=1 // pred_check
      _
    $region19: #{tpu_custom_call.1} parent=1 // pred_check_branch
      %199 = sbr.rel (0) target = $region21
    $region20: #{tpu_custom_call.1} parent=1 // pred_region
      %201 = dma.done [#allocation3], 128
    $region21: #{tpu_custom_call.1} parent=1 // pred_fallthru
      _
    %202 = vsyncpa [#allocation3], 1

</llo_original>
